<compile_context>
chip_gen: v7x
topology: tpu7x:2x2x1
jax: 0.10.0
libtpu: 0.0.40
codegen_flags: <defaults>
</compile_context>

<pallas_src>
import jax
import jax.numpy as jnp
from jax.experimental import pallas as pl
from jax.experimental.pallas import tpu as pltpu


def _round_up(v, m):
    return ((v + m - 1) // m) * m


def make_rnn_kernel(nsub):
    """Build the kernel with `nsub` independent batch sub-chains in the recurrence."""

    def rnn_kernel(x_ref, wxh_ref, whh_ref, bh_ref, why_ref, by_ref,
                   out_ref, h_ref, hist_ref):
        # Grid = (batch tiles, time blocks); time is the sequential axis.
        t_blk = pl.program_id(1)

        # Fresh hidden state at the start of every batch tile's time sweep.
        @pl.when(t_blk == 0)
        def _():
            h_ref[...] = jnp.zeros_like(h_ref)

        TT, TB, I = x_ref.shape
        H = h_ref.shape[-1]
        O = out_ref.shape[-1]
        SB = TB // nsub

        # ---- (1) Hoisted input projection, batched over the whole time block
        # One (TT*TB, I) x (I, H) bf16 MXU matmul instead of TT tiny ones;
        # b_h is folded in here (off the recurrence critical path).
        x_blk = x_ref[...].reshape(TT * TB, I)
        wx = jnp.dot(x_blk, wxh_ref[...], preferred_element_type=jnp.float32)
        hist_ref[...] = (wx + bh_ref[...]).astype(hist_ref.dtype).reshape(TT, TB, H)

        whh = whh_ref[...]

        # ---- (2) Sequential recurrence over the TT timesteps of this block
        # nsub independent batch sub-chains per step -> MXU of one chain
        # overlaps tanh/VPU of another.  hist_ref[t] holds wx+b on entry and
        # the hidden state h_t on exit of step t (bf16).
        h0 = h_ref[...]
        init = tuple(h0[s * SB:(s + 1) * SB, :] for s in range(nsub))

        def step(t, carries):
            row = hist_ref[t]                                  # (TB, H) bf16
            outs = []
            for s in range(nsub):
                pre = (row[s * SB:(s + 1) * SB, :].astype(jnp.float32)
                       + jnp.dot(carries[s], whh,
                                 preferred_element_type=jnp.float32))
                outs.append(jnp.tanh(pre).astype(hist_ref.dtype))
            hist_ref[t] = outs[0] if nsub == 1 else jnp.concatenate(outs, axis=0)
            return tuple(outs)

        final = jax.lax.fori_loop(0, TT, step, init, unroll=True)
        h_ref[...] = final[0] if nsub == 1 else jnp.concatenate(final, axis=0)

        # ---- (3) Hoisted output projection, batched over the whole time block
        # TODO(synk): for modest Hp, pltpu.matmul_push_rhs could pin W_hh in
        # the MXU weight registers across the recurrence (per review).
        h_all = hist_ref[...].reshape(TT * TB, H)
        y = jnp.dot(h_all, why_ref[...], preferred_element_type=jnp.float32)
        y = y + by_ref[...]
        out_ref[...] = y.astype(out_ref.dtype).reshape(TT, TB, O)

    return rnn_kernel


def rnn_forward(x, W_xh, W_hh, b_h, W_hy, b_y):
    """x: (B, T, I) float32 -> (B, T, O) float32 (matches PyTorch RNNLayer.forward)."""
    B, T, I = x.shape
    H = W_xh.shape[1]
    O = W_hy.shape[1]

    # ---------------- pad to TPU-friendly shapes --------------------------
    Ip = _round_up(I, 128)
    Hp = _round_up(H, 128)
    Op = _round_up(O, 128)

    # Batch tiling: sublane-aligned; keep >= 2 batch tiles whenever the padded
    # batch allows it so the "parallel" axis can feed v7x's second TensorCore.
    Bp0 = _round_up(B, 8)
    if Bp0 <= 8:
        TB = Bp0
    elif Bp0 <= 256:
        TB = _round_up((Bp0 + 1) // 2, 8)
    else:
        TB = 128
    Bp = _round_up(B, TB)

    # Time block; shrink if the VMEM estimate exceeds the v7x-safe budget.
    TT = min(T, 32)

    def vmem_bytes(tt, tb):
        return (2 * tt * tb * Ip * 2                    # x tiles (bf16, double-buffered)
                + 2 * tt * tb * Op * 2                  # out tiles (bf16, double-buffered)
                + (Ip * Hp + Hp * Hp + Hp * Op) * 2     # weights (bf16, Buffered(1))
                + (Hp + Op) * 4                         # biases (f32, Buffered(1))
                + tb * Hp * 2                           # hidden-state carry (bf16)
                + tt * tb * Hp * 2)                     # wx / h history (bf16)

    while TT > 8 and vmem_bytes(TT, TB) > 48 * 1024 * 1024:
        TT = max(8, TT // 2)
    Tp = _round_up(T, TT)

    nB = Bp // TB
    nT = Tp // TT

    # Independent recurrence sub-chains (break the matmul->tanh serial chain).
    if TB >= 64 and TB % 32 == 0:
        nsub = 4
    elif TB >= 16 and TB % 16 == 0:
        nsub = 2
    else:
        nsub = 1

    bf16 = jnp.bfloat16
    # TODO(synk): at production sizes, move these pad/transpose relayouts
    # on-chip (batch-major BlockSpecs + on-tile relayout) to avoid two extra
    # HBM round-trips over x and out.
    x_p = jnp.pad(x.astype(bf16), ((0, Bp - B), (0, Tp - T), (0, Ip - I)))
    x_tm = jnp.transpose(x_p, (1, 0, 2))                        # (Tp, Bp, Ip)
    Wxh_p = jnp.pad(W_xh.astype(bf16), ((0, Ip - I), (0, Hp - H)))
    Whh_p = jnp.pad(W_hh.astype(bf16), ((0, Hp - H), (0, Hp - H)))
    bh_p = jnp.pad(b_h.astype(jnp.float32), (0, Hp - H)).reshape(1, Hp)
    Why_p = jnp.pad(W_hy.astype(bf16), ((0, Hp - H), (0, Op - O)))
    by_p = jnp.pad(b_y.astype(jnp.float32), (0, Op - O)).reshape(1, Op)

    # Explicit scoped-VMEM budget: no 2x safety factor, capped at 56 MiB so it
    # never exceeds v7x's 64 MiB physical VMEM per TensorCore.
    vmem_limit = int(min(56 * 1024 * 1024,
                         max(32 * 1024 * 1024, int(1.25 * vmem_bytes(TT, TB)))))

    const1 = pl.Buffered(1)   # constant index_map -> single-buffer the weights

    out_tm = pl.pallas_call(
        make_rnn_kernel(nsub),
        out_shape=jax.ShapeDtypeStruct((Tp, Bp, Op), bf16),
        grid_spec=pltpu.PrefetchScalarGridSpec(
            num_scalar_prefetch=0,
            grid=(nB, nT),
            in_specs=[
                pl.BlockSpec((TT, TB, Ip), lambda b, t: (t, b, 0)),              # x block
                pl.BlockSpec((Ip, Hp), lambda b, t: (0, 0), pipeline_mode=const1),  # W_xh
                pl.BlockSpec((Hp, Hp), lambda b, t: (0, 0), pipeline_mode=const1),  # W_hh
                pl.BlockSpec((1, Hp), lambda b, t: (0, 0), pipeline_mode=const1),   # b_h
                pl.BlockSpec((Hp, Op), lambda b, t: (0, 0), pipeline_mode=const1),  # W_hy
                pl.BlockSpec((1, Op), lambda b, t: (0, 0), pipeline_mode=const1),   # b_y
            ],
            out_specs=pl.BlockSpec((TT, TB, Op), lambda b, t: (t, b, 0)),
            scratch_shapes=[
                pltpu.VMEM((TB, Hp), bf16),        # hidden-state carry (cross time-block)
                pltpu.VMEM((TT, TB, Hp), bf16),    # wx / h history per block
            ],
        ),
        compiler_params=pltpu.CompilerParams(
            # batch tiles are independent (megacore-parallel on v7x);
            # the time axis carries the recurrence -> arbitrary/sequential.
            dimension_semantics=("parallel", "arbitrary"),
            vmem_limit_bytes=vmem_limit,
        ),
    )(x_tm, Wxh_p, Whh_p, bh_p, Why_p, by_p)

    out = jnp.transpose(out_tm, (1, 0, 2)).astype(jnp.float32)   # (Bp, Tp, Op)
    return out[:B, :T, :O]


def rnn_reference(x, W_xh, W_hh, b_h, W_hy, b_y):
    B, T, _ = x.shape
    H = W_xh.shape[1]
    h = jnp.zeros((B, H), jnp.float32)
    outs = []
    for t in range(T):
        h = jnp.tanh(x[:, t, :] @ W_xh + h @ W_hh + b_h)
        outs.append(h @ W_hy + b_y)
    return jnp.stack(outs, axis=1)


def _make_params(key, input_size, hidden_size, output_size, hh_scale=1.0):
    k_wxh, k_whh, k_why = jax.random.split(key, 3)
    s_h = (2.0 / (input_size + hidden_size)) ** 0.5
    s_y = (2.0 / (input_size + output_size)) ** 0.5
    W_xh = jax.random.normal(k_wxh, (input_size, hidden_size), jnp.float32) * s_h
    W_hh = jax.random.normal(k_whh, (hidden_size, hidden_size), jnp.float32) * s_h * hh_scale
    b_h = jnp.zeros((hidden_size,), jnp.float32)
    W_hy = jax.random.normal(k_why, (hidden_size, output_size), jnp.float32) * s_y
    b_y = jnp.zeros((output_size,), jnp.float32)
    return W_xh, W_hh, b_h, W_hy, b_y


if __name__ == "__main__":
    key = jax.random.PRNGKey(0)
    k1, k2, kx1, kx2 = jax.random.split(key, 4)

    # --- Test 1: module-sized demo (B=2, T=8, input=16, hidden=32, output=8) ---
    params1 = _make_params(k1, 16, 32, 8)
    x1 = jax.random.normal(kx1, (2, 8, 16), jnp.float32)
    out1 = jax.block_until_ready(rnn_forward(x1, *params1))
    ref1 = rnn_reference(x1, *params1)
    assert out1.shape == (2, 8, 8)
    # bf16 weights/activations with f32 accumulation -> loosened tolerance.
    err1 = float(jnp.max(jnp.abs(out1 - ref1)))
    assert jnp.allclose(out1, ref1, atol=5e-2, rtol=5e-2), err1

    # --- Test 2: exercises nB=2 batch tiles, nsub=2 recurrence sub-chains,
    # nT=2 time blocks (cross-block hidden-state carry) and time padding.
    # W_hh damped so bf16 recurrent drift stays small over 40 steps.
    params2 = _make_params(k2, 16, 32, 8, hh_scale=0.5)
    x2 = jax.random.normal(kx2, (32, 40, 16), jnp.float32)
    out2 = jax.block_until_ready(rnn_forward(x2, *params2))
    ref2 = rnn_reference(x2, *params2)
    assert out2.shape == (32, 40, 8)
    err2 = float(jnp.max(jnp.abs(out2 - ref2)))
    assert jnp.allclose(out2, ref2, atol=1e-1, rtol=1e-1), err2

    print("KERNEL_OK")
</pallas_src>

<mosaic_0001>
module attributes {stable_mosaic.version = 11 : i64} {
  func.func @rnn_kernel(%arg0: i32, %arg1: i32, %arg2: memref<8x8x128xbf16, #tpu.memory_space<vmem>>, %arg3: memref<128x128xbf16, #tpu.memory_space<vmem>>, %arg4: memref<128x128xbf16, #tpu.memory_space<vmem>>, %arg5: memref<1x128xf32, #tpu.memory_space<vmem>>, %arg6: memref<128x128xbf16, #tpu.memory_space<vmem>>, %arg7: memref<1x128xf32, #tpu.memory_space<vmem>>, %arg8: memref<8x8x128xbf16, #tpu.memory_space<vmem>>, %arg9: memref<8x128xbf16, #tpu.memory_space<vmem>>, %arg10: memref<8x8x128xbf16, #tpu.memory_space<vmem>>) attributes {dimension_semantics = [#tpu.dimension_semantics<parallel>, #tpu.dimension_semantics<arbitrary>], iteration_bounds = array<i64: 1, 1>, scalar_prefetch = 0 : i64, scratch_operands = 2 : i64, tpu.core_type = #tpu.core_type<tc>, window_params = [{transform_indices = @transform_0, window_bounds = array<i64: 8, 8, 128>}, {pipeline_mode = #tpu.pipeline_mode<synchronous>, transform_indices = @transform_1, window_bounds = array<i64: 128, 128>}, {pipeline_mode = #tpu.pipeline_mode<synchronous>, transform_indices = @transform_2, window_bounds = array<i64: 128, 128>}, {pipeline_mode = #tpu.pipeline_mode<synchronous>, transform_indices = @transform_3, window_bounds = array<i64: 1, 128>}, {pipeline_mode = #tpu.pipeline_mode<synchronous>, transform_indices = @transform_4, window_bounds = array<i64: 128, 128>}, {pipeline_mode = #tpu.pipeline_mode<synchronous>, transform_indices = @transform_5, window_bounds = array<i64: 1, 128>}, {transform_indices = @transform_6, window_bounds = array<i64: 8, 8, 128>}]} {
    %c0_i32 = arith.constant 0 : i32
    %0 = arith.cmpi eq, %arg1, %c0_i32 : i32
    %1 = arith.extui %0 : i1 to i32
    %c0_i32_0 = arith.constant 0 : i32
    %2 = arith.cmpi ne, %1, %c0_i32_0 : i32
    scf.if %2 {
      %cst_68 = arith.constant 0.000000e+00 : bf16
      %122 = vector.broadcast %cst_68 : bf16 to vector<8x128xbf16>
      %c0_69 = arith.constant 0 : index
      %c0_70 = arith.constant 0 : index
      %123 = vector.load %arg9[%c0_69, %c0_70] : memref<8x128xbf16, #tpu.memory_space<vmem>>, vector<8x128xbf16>
      tpu.vector_store %arg9[%c0_69, %c0_70], %122 {strides = array<i32>} : memref<8x128xbf16, #tpu.memory_space<vmem>>, vector<8x128xbf16>,
    } else {
    }
    %c0 = arith.constant 0 : index
    %c0_1 = arith.constant 0 : index
    %c0_2 = arith.constant 0 : index
    %3 = vector.load %arg2[%c0, %c0_1, %c0_2] : memref<8x8x128xbf16, #tpu.memory_space<vmem>>, vector<8x8x128xbf16>
    %4 = vector.shape_cast %3 : vector<8x8x128xbf16> to vector<64x128xbf16>
    %c0_3 = arith.constant 0 : index
    %c0_4 = arith.constant 0 : index
    %5 = vector.load %arg3[%c0_3, %c0_4] : memref<128x128xbf16, #tpu.memory_space<vmem>>, vector<128x128xbf16>
    %cst = arith.constant dense<0.000000e+00> : vector<64x128xf32>
    %6 = tpu.matmul %4, %5, %cst {dimension_numbers = #tpu.dot_dimension_numbers<[1], [0], [0], [1], [0, 0, 1, 1], [], []>} : vector<64x128xbf16>, vector<128x128xbf16>, vector<64x128xf32> -> vector<64x128xf32>
    %c0_5 = arith.constant 0 : index
    %c0_6 = arith.constant 0 : index
    %7 = vector.load %arg5[%c0_5, %c0_6] : memref<1x128xf32, #tpu.memory_space<vmem>>, vector<1x128xf32>
    %8 = vector.broadcast %7 : vector<1x128xf32> to vector<64x128xf32>
    %9 = arith.addf %6, %8 : vector<64x128xf32>
    %10 = arith.truncf %9 : vector<64x128xf32> to vector<64x128xbf16>
    %11 = vector.shape_cast %10 : vector<64x128xbf16> to vector<8x8x128xbf16>
    %c0_7 = arith.constant 0 : index
    %c0_8 = arith.constant 0 : index
    %c0_9 = arith.constant 0 : index
    %12 = vector.load %arg10[%c0_7, %c0_8, %c0_9] : memref<8x8x128xbf16, #tpu.memory_space<vmem>>, vector<8x8x128xbf16>
    tpu.vector_store %arg10[%c0_7, %c0_8, %c0_9], %11 {strides = array<i32>} : memref<8x8x128xbf16, #tpu.memory_space<vmem>>, vector<8x8x128xbf16>,
    %c0_10 = arith.constant 0 : index
    %c0_11 = arith.constant 0 : index
    %13 = vector.load %arg4[%c0_10, %c0_11] : memref<128x128xbf16, #tpu.memory_space<vmem>>, vector<128x128xbf16>
    %c0_12 = arith.constant 0 : index
    %c0_13 = arith.constant 0 : index
    %14 = vector.load %arg9[%c0_12, %c0_13] : memref<8x128xbf16, #tpu.memory_space<vmem>>, vector<8x128xbf16>
    %c0_i32_14 = arith.constant 0 : i32
    %15 = arith.index_cast %c0_i32_14 : i32 to index
    %c0_15 = arith.constant 0 : index
    %c0_16 = arith.constant 0 : index
    %16 = vector.load %arg10[%15, %c0_15, %c0_16] : memref<8x8x128xbf16, #tpu.memory_space<vmem>>, vector<1x8x128xbf16>
    %17 = vector.shape_cast %16 : vector<1x8x128xbf16> to vector<8x128xbf16>
    %18 = arith.extf %17 : vector<8x128xbf16> to vector<8x128xf32>
    %cst_17 = arith.constant dense<0.000000e+00> : vector<8x128xf32>
    %19 = tpu.matmul %14, %13, %cst_17 {dimension_numbers = #tpu.dot_dimension_numbers<[1], [0], [0], [1], [0, 0, 1, 1], [], []>} : vector<8x128xbf16>, vector<128x128xbf16>, vector<8x128xf32> -> vector<8x128xf32>
    %20 = arith.addf %18, %19 : vector<8x128xf32>
    %21 = math.tanh %20 : vector<8x128xf32>
    %22 = arith.truncf %21 : vector<8x128xf32> to vector<8x128xbf16>
    %23 = arith.index_cast %c0_i32_14 : i32 to index
    %c0_18 = arith.constant 0 : index
    %c0_19 = arith.constant 0 : index
    %24 = vector.load %arg10[%23, %c0_18, %c0_19] : memref<8x8x128xbf16, #tpu.memory_space<vmem>>, vector<1x8x128xbf16>
    %25 = vector.shape_cast %24 : vector<1x8x128xbf16> to vector<8x128xbf16>
    %26 = vector.shape_cast %22 : vector<8x128xbf16> to vector<1x8x128xbf16>
    tpu.vector_store %arg10[%23, %c0_18, %c0_19], %26 {strides = array<i32>} : memref<8x8x128xbf16, #tpu.memory_space<vmem>>, vector<1x8x128xbf16>,
    %c1_i32 = arith.constant 1 : i32
    %27 = arith.index_cast %c1_i32 : i32 to index
    %c0_20 = arith.constant 0 : index
    %c0_21 = arith.constant 0 : index
    %28 = vector.load %arg10[%27, %c0_20, %c0_21] : memref<8x8x128xbf16, #tpu.memory_space<vmem>>, vector<1x8x128xbf16>
    %29 = vector.shape_cast %28 : vector<1x8x128xbf16> to vector<8x128xbf16>
    %30 = arith.extf %29 : vector<8x128xbf16> to vector<8x128xf32>
    %cst_22 = arith.constant dense<0.000000e+00> : vector<8x128xf32>
    %31 = tpu.matmul %22, %13, %cst_22 {dimension_numbers = #tpu.dot_dimension_numbers<[1], [0], [0], [1], [0, 0, 1, 1], [], []>} : vector<8x128xbf16>, vector<128x128xbf16>, vector<8x128xf32> -> vector<8x128xf32>
    %32 = arith.addf %30, %31 : vector<8x128xf32>
    %33 = math.tanh %32 : vector<8x128xf32>
    %34 = arith.truncf %33 : vector<8x128xf32> to vector<8x128xbf16>
    %35 = arith.index_cast %c1_i32 : i32 to index
    %c0_23 = arith.constant 0 : index
    %c0_24 = arith.constant 0 : index
    %36 = vector.load %arg10[%35, %c0_23, %c0_24] : memref<8x8x128xbf16, #tpu.memory_space<vmem>>, vector<1x8x128xbf16>
    %37 = vector.shape_cast %36 : vector<1x8x128xbf16> to vector<8x128xbf16>
    %38 = vector.shape_cast %34 : vector<8x128xbf16> to vector<1x8x128xbf16>
    tpu.vector_store %arg10[%35, %c0_23, %c0_24], %38 {strides = array<i32>} : memref<8x8x128xbf16, #tpu.memory_space<vmem>>, vector<1x8x128xbf16>,
    %c2_i32 = arith.constant 2 : i32
    %39 = arith.index_cast %c2_i32 : i32 to index
    %c0_25 = arith.constant 0 : index
    %c0_26 = arith.constant 0 : index
    %40 = vector.load %arg10[%39, %c0_25, %c0_26] : memref<8x8x128xbf16, #tpu.memory_space<vmem>>, vector<1x8x128xbf16>
    %41 = vector.shape_cast %40 : vector<1x8x128xbf16> to vector<8x128xbf16>
    %42 = arith.extf %41 : vector<8x128xbf16> to vector<8x128xf32>
    %cst_27 = arith.constant dense<0.000000e+00> : vector<8x128xf32>
    %43 = tpu.matmul %34, %13, %cst_27 {dimension_numbers = #tpu.dot_dimension_numbers<[1], [0], [0], [1], [0, 0, 1, 1], [], []>} : vector<8x128xbf16>, vector<128x128xbf16>, vector<8x128xf32> -> vector<8x128xf32>
    %44 = arith.addf %42, %43 : vector<8x128xf32>
    %45 = math.tanh %44 : vector<8x128xf32>
    %46 = arith.truncf %45 : vector<8x128xf32> to vector<8x128xbf16>
    %47 = arith.index_cast %c2_i32 : i32 to index
    %c0_28 = arith.constant 0 : index
    %c0_29 = arith.constant 0 : index
    %48 = vector.load %arg10[%47, %c0_28, %c0_29] : memref<8x8x128xbf16, #tpu.memory_space<vmem>>, vector<1x8x128xbf16>
    %49 = vector.shape_cast %48 : vector<1x8x128xbf16> to vector<8x128xbf16>
    %50 = vector.shape_cast %46 : vector<8x128xbf16> to vector<1x8x128xbf16>
    tpu.vector_store %arg10[%47, %c0_28, %c0_29], %50 {strides = array<i32>} : memref<8x8x128xbf16, #tpu.memory_space<vmem>>, vector<1x8x128xbf16>,
    %c3_i32 = arith.constant 3 : i32
    %51 = arith.index_cast %c3_i32 : i32 to index
    %c0_30 = arith.constant 0 : index
    %c0_31 = arith.constant 0 : index
    %52 = vector.load %arg10[%51, %c0_30, %c0_31] : memref<8x8x128xbf16, #tpu.memory_space<vmem>>, vector<1x8x128xbf16>
    %53 = vector.shape_cast %52 : vector<1x8x128xbf16> to vector<8x128xbf16>
    %54 = arith.extf %53 : vector<8x128xbf16> to vector<8x128xf32>
    %cst_32 = arith.constant dense<0.000000e+00> : vector<8x128xf32>
    %55 = tpu.matmul %46, %13, %cst_32 {dimension_numbers = #tpu.dot_dimension_numbers<[1], [0], [0], [1], [0, 0, 1, 1], [], []>} : vector<8x128xbf16>, vector<128x128xbf16>, vector<8x128xf32> -> vector<8x128xf32>
    %56 = arith.addf %54, %55 : vector<8x128xf32>
    %57 = math.tanh %56 : vector<8x128xf32>
    %58 = arith.truncf %57 : vector<8x128xf32> to vector<8x128xbf16>
    %59 = arith.index_cast %c3_i32 : i32 to index
    %c0_33 = arith.constant 0 : index
    %c0_34 = arith.constant 0 : index
    %60 = vector.load %arg10[%59, %c0_33, %c0_34] : memref<8x8x128xbf16, #tpu.memory_space<vmem>>, vector<1x8x128xbf16>
    %61 = vector.shape_cast %60 : vector<1x8x128xbf16> to vector<8x128xbf16>
    %62 = vector.shape_cast %58 : vector<8x128xbf16> to vector<1x8x128xbf16>
    tpu.vector_store %arg10[%59, %c0_33, %c0_34], %62 {strides = array<i32>} : memref<8x8x128xbf16, #tpu.memory_space<vmem>>, vector<1x8x128xbf16>,
    %c4_i32 = arith.constant 4 : i32
    %63 = arith.index_cast %c4_i32 : i32 to index
    %c0_35 = arith.constant 0 : index
    %c0_36 = arith.constant 0 : index
    %64 = vector.load %arg10[%63, %c0_35, %c0_36] : memref<8x8x128xbf16, #tpu.memory_space<vmem>>, vector<1x8x128xbf16>
    %65 = vector.shape_cast %64 : vector<1x8x128xbf16> to vector<8x128xbf16>
    %66 = arith.extf %65 : vector<8x128xbf16> to vector<8x128xf32>
    %cst_37 = arith.constant dense<0.000000e+00> : vector<8x128xf32>
    %67 = tpu.matmul %58, %13, %cst_37 {dimension_numbers = #tpu.dot_dimension_numbers<[1], [0], [0], [1], [0, 0, 1, 1], [], []>} : vector<8x128xbf16>, vector<128x128xbf16>, vector<8x128xf32> -> vector<8x128xf32>
    %68 = arith.addf %66, %67 : vector<8x128xf32>
    %69 = math.tanh %68 : vector<8x128xf32>
    %70 = arith.truncf %69 : vector<8x128xf32> to vector<8x128xbf16>
    %71 = arith.index_cast %c4_i32 : i32 to index
    %c0_38 = arith.constant 0 : index
    %c0_39 = arith.constant 0 : index
    %72 = vector.load %arg10[%71, %c0_38, %c0_39] : memref<8x8x128xbf16, #tpu.memory_space<vmem>>, vector<1x8x128xbf16>
    %73 = vector.shape_cast %72 : vector<1x8x128xbf16> to vector<8x128xbf16>
    %74 = vector.shape_cast %70 : vector<8x128xbf16> to vector<1x8x128xbf16>
    tpu.vector_store %arg10[%71, %c0_38, %c0_39], %74 {strides = array<i32>} : memref<8x8x128xbf16, #tpu.memory_space<vmem>>, vector<1x8x128xbf16>,
    %c5_i32 = arith.constant 5 : i32
    %75 = arith.index_cast %c5_i32 : i32 to index
    %c0_40 = arith.constant 0 : index
    %c0_41 = arith.constant 0 : index
    %76 = vector.load %arg10[%75, %c0_40, %c0_41] : memref<8x8x128xbf16, #tpu.memory_space<vmem>>, vector<1x8x128xbf16>
    %77 = vector.shape_cast %76 : vector<1x8x128xbf16> to vector<8x128xbf16>
    %78 = arith.extf %77 : vector<8x128xbf16> to vector<8x128xf32>
    %cst_42 = arith.constant dense<0.000000e+00> : vector<8x128xf32>
    %79 = tpu.matmul %70, %13, %cst_42 {dimension_numbers = #tpu.dot_dimension_numbers<[1], [0], [0], [1], [0, 0, 1, 1], [], []>} : vector<8x128xbf16>, vector<128x128xbf16>, vector<8x128xf32> -> vector<8x128xf32>
    %80 = arith.addf %78, %79 : vector<8x128xf32>
    %81 = math.tanh %80 : vector<8x128xf32>
    %82 = arith.truncf %81 : vector<8x128xf32> to vector<8x128xbf16>
    %83 = arith.index_cast %c5_i32 : i32 to index
    %c0_43 = arith.constant 0 : index
    %c0_44 = arith.constant 0 : index
    %84 = vector.load %arg10[%83, %c0_43, %c0_44] : memref<8x8x128xbf16, #tpu.memory_space<vmem>>, vector<1x8x128xbf16>
    %85 = vector.shape_cast %84 : vector<1x8x128xbf16> to vector<8x128xbf16>
    %86 = vector.shape_cast %82 : vector<8x128xbf16> to vector<1x8x128xbf16>
    tpu.vector_store %arg10[%83, %c0_43, %c0_44], %86 {strides = array<i32>} : memref<8x8x128xbf16, #tpu.memory_space<vmem>>, vector<1x8x128xbf16>,
    %c6_i32 = arith.constant 6 : i32
    %87 = arith.index_cast %c6_i32 : i32 to index
    %c0_45 = arith.constant 0 : index
    %c0_46 = arith.constant 0 : index
    %88 = vector.load %arg10[%87, %c0_45, %c0_46] : memref<8x8x128xbf16, #tpu.memory_space<vmem>>, vector<1x8x128xbf16>
    %89 = vector.shape_cast %88 : vector<1x8x128xbf16> to vector<8x128xbf16>
    %90 = arith.extf %89 : vector<8x128xbf16> to vector<8x128xf32>
    %cst_47 = arith.constant dense<0.000000e+00> : vector<8x128xf32>
    %91 = tpu.matmul %82, %13, %cst_47 {dimension_numbers = #tpu.dot_dimension_numbers<[1], [0], [0], [1], [0, 0, 1, 1], [], []>} : vector<8x128xbf16>, vector<128x128xbf16>, vector<8x128xf32> -> vector<8x128xf32>
    %92 = arith.addf %90, %91 : vector<8x128xf32>
    %93 = math.tanh %92 : vector<8x128xf32>
    %94 = arith.truncf %93 : vector<8x128xf32> to vector<8x128xbf16>
    %95 = arith.index_cast %c6_i32 : i32 to index
    %c0_48 = arith.constant 0 : index
    %c0_49 = arith.constant 0 : index
    %96 = vector.load %arg10[%95, %c0_48, %c0_49] : memref<8x8x128xbf16, #tpu.memory_space<vmem>>, vector<1x8x128xbf16>
    %97 = vector.shape_cast %96 : vector<1x8x128xbf16> to vector<8x128xbf16>
    %98 = vector.shape_cast %94 : vector<8x128xbf16> to vector<1x8x128xbf16>
    tpu.vector_store %arg10[%95, %c0_48, %c0_49], %98 {strides = array<i32>} : memref<8x8x128xbf16, #tpu.memory_space<vmem>>, vector<1x8x128xbf16>,
    %c7_i32 = arith.constant 7 : i32
    %99 = arith.index_cast %c7_i32 : i32 to index
    %c0_50 = arith.constant 0 : index
    %c0_51 = arith.constant 0 : index
    %100 = vector.load %arg10[%99, %c0_50, %c0_51] : memref<8x8x128xbf16, #tpu.memory_space<vmem>>, vector<1x8x128xbf16>
    %101 = vector.shape_cast %100 : vector<1x8x128xbf16> to vector<8x128xbf16>
    %102 = arith.extf %101 : vector<8x128xbf16> to vector<8x128xf32>
    %cst_52 = arith.constant dense<0.000000e+00> : vector<8x128xf32>
    %103 = tpu.matmul %94, %13, %cst_52 {dimension_numbers = #tpu.dot_dimension_numbers<[1], [0], [0], [1], [0, 0, 1, 1], [], []>} : vector<8x128xbf16>, vector<128x128xbf16>, vector<8x128xf32> -> vector<8x128xf32>
    %104 = arith.addf %102, %103 : vector<8x128xf32>
    %105 = math.tanh %104 : vector<8x128xf32>
    %106 = arith.truncf %105 : vector<8x128xf32> to vector<8x128xbf16>
    %107 = arith.index_cast %c7_i32 : i32 to index
    %c0_53 = arith.constant 0 : index
    %c0_54 = arith.constant 0 : index
    %108 = vector.load %arg10[%107, %c0_53, %c0_54] : memref<8x8x128xbf16, #tpu.memory_space<vmem>>, vector<1x8x128xbf16>
    %109 = vector.shape_cast %108 : vector<1x8x128xbf16> to vector<8x128xbf16>
    %110 = vector.shape_cast %106 : vector<8x128xbf16> to vector<1x8x128xbf16>
    tpu.vector_store %arg10[%107, %c0_53, %c0_54], %110 {strides = array<i32>} : memref<8x8x128xbf16, #tpu.memory_space<vmem>>, vector<1x8x128xbf16>,
    %c8_i32 = arith.constant 8 : i32
    %c0_55 = arith.constant 0 : index
    %c0_56 = arith.constant 0 : index
    %111 = vector.load %arg9[%c0_55, %c0_56] : memref<8x128xbf16, #tpu.memory_space<vmem>>, vector<8x128xbf16>
    tpu.vector_store %arg9[%c0_55, %c0_56], %106 {strides = array<i32>} : memref<8x128xbf16, #tpu.memory_space<vmem>>, vector<8x128xbf16>,
    %c0_57 = arith.constant 0 : index
    %c0_58 = arith.constant 0 : index
    %c0_59 = arith.constant 0 : index
    %112 = vector.load %arg10[%c0_57, %c0_58, %c0_59] : memref<8x8x128xbf16, #tpu.memory_space<vmem>>, vector<8x8x128xbf16>
    %113 = vector.shape_cast %112 : vector<8x8x128xbf16> to vector<64x128xbf16>
    %c0_60 = arith.constant 0 : index
    %c0_61 = arith.constant 0 : index
    %114 = vector.load %arg6[%c0_60, %c0_61] : memref<128x128xbf16, #tpu.memory_space<vmem>>, vector<128x128xbf16>
    %cst_62 = arith.constant dense<0.000000e+00> : vector<64x128xf32>
    %115 = tpu.matmul %113, %114, %cst_62 {dimension_numbers = #tpu.dot_dimension_numbers<[1], [0], [0], [1], [0, 0, 1, 1], [], []>} : vector<64x128xbf16>, vector<128x128xbf16>, vector<64x128xf32> -> vector<64x128xf32>
    %c0_63 = arith.constant 0 : index
    %c0_64 = arith.constant 0 : index
    %116 = vector.load %arg7[%c0_63, %c0_64] : memref<1x128xf32, #tpu.memory_space<vmem>>, vector<1x128xf32>
    %117 = vector.broadcast %116 : vector<1x128xf32> to vector<64x128xf32>
    %118 = arith.addf %115, %117 : vector<64x128xf32>
    %119 = arith.truncf %118 : vector<64x128xf32> to vector<64x128xbf16>
    %120 = vector.shape_cast %119 : vector<64x128xbf16> to vector<8x8x128xbf16>
    %c0_65 = arith.constant 0 : index
    %c0_66 = arith.constant 0 : index
    %c0_67 = arith.constant 0 : index
    %121 = vector.load %arg8[%c0_65, %c0_66, %c0_67] : memref<8x8x128xbf16, #tpu.memory_space<vmem>>, vector<8x8x128xbf16>
    tpu.vector_store %arg8[%c0_65, %c0_66, %c0_67], %120 {strides = array<i32>} : memref<8x8x128xbf16, #tpu.memory_space<vmem>>, vector<8x8x128xbf16>,
    return
  }
  func.func @transform_0(%arg0: i32, %arg1: i32) -> (i32, i32, i32) {
    %c0_i32 = arith.constant 0 : i32
    %c0_i32_0 = arith.constant 0 : i32
    return %arg1, %arg0, %c0_i32 : i32, i32, i32
  }
  func.func @transform_1(%arg0: i32, %arg1: i32) -> (i32, i32) {
    %c0_i32 = arith.constant 0 : i32
    %c0_i32_0 = arith.constant 0 : i32
    %c0_i32_1 = arith.constant 0 : i32
    return %c0_i32, %c0_i32_0 : i32, i32
  }
  func.func @transform_2(%arg0: i32, %arg1: i32) -> (i32, i32) {
    %c0_i32 = arith.constant 0 : i32
    %c0_i32_0 = arith.constant 0 : i32
    %c0_i32_1 = arith.constant 0 : i32
    return %c0_i32, %c0_i32_0 : i32, i32
  }
  func.func @transform_3(%arg0: i32, %arg1: i32) -> (i32, i32) {
    %c0_i32 = arith.constant 0 : i32
    %c0_i32_0 = arith.constant 0 : i32
    %c0_i32_1 = arith.constant 0 : i32
    return %c0_i32, %c0_i32_0 : i32, i32
  }
  func.func @transform_4(%arg0: i32, %arg1: i32) -> (i32, i32) {
    %c0_i32 = arith.constant 0 : i32
    %c0_i32_0 = arith.constant 0 : i32
    %c0_i32_1 = arith.constant 0 : i32
    return %c0_i32, %c0_i32_0 : i32, i32
  }
  func.func @transform_5(%arg0: i32, %arg1: i32) -> (i32, i32) {
    %c0_i32 = arith.constant 0 : i32
    %c0_i32_0 = arith.constant 0 : i32
    %c0_i32_1 = arith.constant 0 : i32
    return %c0_i32, %c0_i32_0 : i32, i32
  }
  func.func @transform_6(%arg0: i32, %arg1: i32) -> (i32, i32, i32) {
    %c0_i32 = arith.constant 0 : i32
    %c0_i32_0 = arith.constant 0 : i32
    return %arg1, %arg0, %c0_i32 : i32, i32, i32
  }
}

</mosaic_0001>

<llo_original>
// kernel: tpu_custom_call.1
$region0: #{tpu_custom_call.1}
  #allocation0 [shape = 'u32[]', space=smem, size = 0x4, offset = 0x4, fixed_abs, tag = 'smem constant byte address 0x4 - core index']
  #allocation1 [shape = 'u32[144,128]{1,0:T(1,128)}', space=vmem, size = 0x12000, scoped, tag = 'internal scratch']
  #allocation2 [shape = 'bf16[8,128]{1,0:T(8,128)(2,1)}', space=vmem, size = 0x800, scoped, tag = 'scratch operand']
  #allocation3 [shape = 'bf16[8,8,128]{2,1,0:T(8,128)(2,1)}', space=vmem, size = 0x4000, scoped, tag = 'scratch operand']
  %s0 = inlined_call_operand.hbm [shape: bf16[8,8,128], index: 0, kind: input, shape index: {}]
  %s1 = inlined_call_operand.hbm [shape: bf16[128,128], index: 1, kind: input, shape index: {}]
  %s2 = inlined_call_operand.hbm [shape: bf16[128,128], index: 2, kind: input, shape index: {}]
  %s3 = inlined_call_operand.vmem [shape: f32[1,128], index: 3, kind: input, shape index: {}]
  %s4 = inlined_call_operand.hbm [shape: bf16[128,128], index: 4, kind: input, shape index: {}]
  %s5 = inlined_call_operand.vmem [shape: f32[1,128], index: 5, kind: input, shape index: {}]
  %s6 = inlined_call_operand.hbm [shape: bf16[8,8,128], index: 6, kind: output, shape index: {}]
  %s7 = sld [smem:[#allocation0]]
  $region54: #{tpu_custom_call.1} parent=0
    _
  %s9 = ssub.s32 1, %s7
  %s10 = scalar_select 0, %s9, %s7
  $region1: #{tpu_custom_call.1} parent=0
    #allocation4 [shape = 'u8[16384]{0}', space=vmem, size = 0x4000, scoped, tag = 'input window, operand 0, single buffered']
    #allocation5 [shape = 's32[1]{0}', space=sflag, size = 0x4, scoped, tag = 'scoped memory for tpu_custom_call.1']
    #allocation6 [shape = 's32[1]{0}', space=sflag, size = 0x4, scoped, tag = 'scoped memory for tpu_custom_call.1']
    #allocation7 [shape = 'u8[32768]{0}', space=vmem, size = 0x8000, scoped, tag = 'input window, operand 1, single buffered']
    #allocation8 [shape = 's32[1]{0}', space=sflag, size = 0x4, scoped, tag = 'scoped memory for tpu_custom_call.1']
    #allocation9 [shape = 'u8[32768]{0}', space=vmem, size = 0x8000, scoped, tag = 'input window, operand 2, single buffered']
    #allocation10 [shape = 'u8[32768]{0}', space=vmem, size = 0x8000, scoped, tag = 'input window, operand 4, single buffered']
    #allocation11 [shape = 's32[1]{0}', space=sflag, size = 0x4, scoped, tag = 'scoped memory for tpu_custom_call.1']
    #allocation12 [shape = 'u8[16384]{0}', space=vmem, size = 0x4000, scoped, tag = 'output window, operand 0, single buffered']
    %11 = vsyncpa [#allocation5], 0
    %12 = vsyncpa [#allocation8], 0
    %13 = vsyncpa [#allocation11], 0
    %14 = vsyncpa [#allocation6], 0
    // Predicated region
    $region2: #{tpu_custom_call.1} parent=1 // pred_check
      _
    $region3: #{tpu_custom_call.1} parent=1 // pred_check_branch
      %16 = sbr.rel (0) target = $region5
    $region4: #{tpu_custom_call.1} parent=1 // pred_region
      %s18 = ssub.s32 512, 512
      %19 = vsyncadd [#allocation5], %s18
      %s20 = sshll.u32 [#allocation4], 4
      %s21 = int_to_ptr.vmem [resolvable:$true] %s20
      %26 = dma.hbm_to_vmem [thread:$0]  %s0, 512, %s21, [#allocation5], 64, 64, 4
    $region5: #{tpu_custom_call.1} parent=1 // pred_fallthru
      _
    // Predicated region
    $region6: #{tpu_custom_call.1} parent=1 // pred_check
      _
    $region7: #{tpu_custom_call.1} parent=1 // pred_check_branch
      %28 = sbr.rel (0) target = $region9
    $region8: #{tpu_custom_call.1} parent=1 // pred_region
      %s30 = ssub.s32 1024, 1024
      %31 = vsyncadd [#allocation8], %s30
      %s32 = sshll.u32 [#allocation7], 4
      %s33 = int_to_ptr.vmem [resolvable:$true] %s32
      %38 = dma.hbm_to_vmem [thread:$0]  %s1, 1024, %s33, [#allocation8], 64, 64, 4
    $region9: #{tpu_custom_call.1} parent=1 // pred_fallthru
      _
    // Predicated region
    $region10: #{tpu_custom_call.1} parent=1 // pred_check
      _
    $region11: #{tpu_custom_call.1} parent=1 // pred_check_branch
      %40 = sbr.rel (0) target = $region13
    $region12: #{tpu_custom_call.1} parent=1 // pred_region
      %s42 = ssub.s32 1024, 1024
      %43 = vsyncadd [#allocation8], %s42
      %s44 = sshll.u32 [#allocation9], 4
      %s45 = int_to_ptr.vmem [resolvable:$true] %s44
      %50 = dma.hbm_to_vmem [thread:$0]  %s2, 1024, %s45, [#allocation8], 64, 64, 4
    $region13: #{tpu_custom_call.1} parent=1 // pred_fallthru
      _
    // Predicated region
    $region14: #{tpu_custom_call.1} parent=1 // pred_check
      _
    $region15: #{tpu_custom_call.1} parent=1 // pred_check_branch
      %52 = sbr.rel (0) target = $region17
    $region16: #{tpu_custom_call.1} parent=1 // pred_region
      _
    $region17: #{tpu_custom_call.1} parent=1 // pred_fallthru
      _
    // Predicated region
    $region18: #{tpu_custom_call.1} parent=1 // pred_check
      _
    $region19: #{tpu_custom_call.1} parent=1 // pred_check_branch
      %54 = sbr.rel (0) target = $region21
    $region20: #{tpu_custom_call.1} parent=1 // pred_region
      %s56 = ssub.s32 1024, 1024
      %57 = vsyncadd [#allocation11], %s56
      %s58 = sshll.u32 [#allocation10], 4
      %s59 = int_to_ptr.vmem [resolvable:$true] %s58
      %64 = dma.hbm_to_vmem [thread:$0]  %s4, 1024, %s59, [#allocation11], 64, 64, 4
    $region21: #{tpu_custom_call.1} parent=1 // pred_fallthru
      _
    // Predicated region
    $region22: #{tpu_custom_call.1} parent=1 // pred_check
      _
    $region23: #{tpu_custom_call.1} parent=1 // pred_check_branch
      %66 = sbr.rel (0) target = $region25
    $region24: #{tpu_custom_call.1} parent=1 // pred_region
      _
    $region25: #{tpu_custom_call.1} parent=1 // pred_fallthru
      _
    // Predicated region
    $region26: #{tpu_custom_call.1} parent=1 // pred_check
      _
    $region27: #{tpu_custom_call.1} parent=1 // pred_check_branch
      %68 = sbr.rel (0) target = $region29
    $region28: #{tpu_custom_call.1} parent=1 // pred_region
      %69 = dma.done [#allocation5], 512
    $region29: #{tpu_custom_call.1} parent=1 // pred_fallthru
      _
    // Predicated region
    $region30: #{tpu_custom_call.1} parent=1 // pred_check
      _
    $region31: #{tpu_custom_call.1} parent=1 // pred_check_branch
      %71 = sbr.rel (0) target = $region33
    $region32: #{tpu_custom_call.1} parent=1 // pred_region
      %72 = dma.done [#allocation8], 1024
    $region33: #{tpu_custom_call.1} parent=1 // pred_fallthru
      _
    // Predicated region
    $region34: #{tpu_custom_call.1} parent=1 // pred_check
      _
    $region35: #{tpu_custom_call.1} parent=1 // pred_check_branch
      %74 = sbr.rel (0) target = $region37
    $region36: #{tpu_custom_call.1} parent=1 // pred_region
      %75 = dma.done [#allocation8], 1024
    $region37: #{tpu_custom_call.1} parent=1 // pred_fallthru
      _
    // Predicated region
    $region38: #{tpu_custom_call.1} parent=1 // pred_check
      _
    $region39: #{tpu_custom_call.1} parent=1 // pred_check_branch
      %77 = sbr.rel (0) target = $region41
    $region40: #{tpu_custom_call.1} parent=1 // pred_region
      %78 = dma.done [#allocation11], 1024
    $region41: #{tpu_custom_call.1} parent=1 // pred_fallthru
      _
    %p80 = scmp.eq.s32.totalorder 0, 0
    // Predicated region
    $region42: #{tpu_custom_call.1} parent=1 // pred_check
      %p81 = pneg %p80
    $region43: #{tpu_custom_call.1} parent=1 // pred_check_branch
      %83 = sbr.rel (%p81) target = $region45
    $region44: #{tpu_custom_call.1} parent=1 // pred_region
      %84 = vst [vmem:[#allocation2] sm:$0xf] 0
    $region45: #{tpu_custom_call.1} parent=1 // pred_fallthru
      _
    %v85 = vld [vmem:[#allocation4] sm:$0xf]
    %v86 = vld [vmem:[#allocation4 + $0x4] sm:$0xf]
    %v87 = vld [vmem:[#allocation4 + $0x8] sm:$0xf]
    %v88 = vld [vmem:[#allocation4 + $0xc] sm:$0xf]
    %v89 = vld [vmem:[#allocation4 + $0x10] sm:$0xf]
    %v90 = vld [vmem:[#allocation4 + $0x14] sm:$0xf]
    %v91 = vld [vmem:[#allocation4 + $0x18] sm:$0xf]
    %v92 = vld [vmem:[#allocation4 + $0x1c] sm:$0xf]
    %v93 = vld [vmem:[#allocation7] sm:$0xf]
    %v94 = vld [vmem:[#allocation7 + $0x4] sm:$0xf]
    %v95 = vld [vmem:[#allocation7 + $0x8] sm:$0xf]
    %v96 = vld [vmem:[#allocation7 + $0xc] sm:$0xf]
    %v97 = vld [vmem:[#allocation7 + $0x10] sm:$0xf]
    %v98 = vld [vmem:[#allocation7 + $0x14] sm:$0xf]
    %v99 = vld [vmem:[#allocation7 + $0x18] sm:$0xf]
    %v100 = vld [vmem:[#allocation7 + $0x1c] sm:$0xf]
    %v101 = vld [vmem:[#allocation7 + $0x20] sm:$0xf]
    %v102 = vld [vmem:[#allocation7 + $0x24] sm:$0xf]
    %v103 = vld [vmem:[#allocation7 + $0x28] sm:$0xf]
    %v104 = vld [vmem:[#allocation7 + $0x2c] sm:$0xf]
    %v105 = vld [vmem:[#allocation7 + $0x30] sm:$0xf]
    %v106 = vld [vmem:[#allocation7 + $0x34] sm:$0xf]
    %v107 = vld [vmem:[#allocation7 + $0x38] sm:$0xf]
    %v108 = vld [vmem:[#allocation7 + $0x3c] sm:$0xf]
    %v109 = vld [vmem:[%s3] sm:$0x1]
    %v111 = vlaneseq
    %v112 = vshrl.u32 %v111, 7
    %v113 = vsub.s32 0, %v112
    %v114 = vrot.slane %v109, %v113
    %v124 = vunpack.c.l.b16 %v85
    %v125 = vunpack.c.l.b16 %v86
    %v126 = vunpack.c.l.b16 %v87
    %v127 = vunpack.c.l.b16 %v88
    %v128 = vunpack.c.l.b16 %v89
    %v129 = vunpack.c.l.b16 %v90
    %v130 = vunpack.c.l.b16 %v91
    %v131 = vunpack.c.l.b16 %v92
    %v132 = vpack.c.b16 %v125, %v124
    %v133 = vpack.c.b16 %v127, %v126
    %v134 = vpack.c.b16 %v129, %v128
    %v135 = vpack.c.b16 %v131, %v130
    %v156 = vunpack.c.l.b16 %v93
    %v157 = vunpack.c.l.b16 %v94
    %v158 = vunpack.c.l.b16 %v95
    %v159 = vunpack.c.l.b16 %v96
    %v160 = vunpack.c.l.b16 %v97
    %v161 = vunpack.c.l.b16 %v98
    %v162 = vunpack.c.l.b16 %v99
    %v163 = vunpack.c.l.b16 %v100
    %v164 = vunpack.c.l.b16 %v101
    %v165 = vunpack.c.l.b16 %v102
    %v166 = vunpack.c.l.b16 %v103
    %v167 = vunpack.c.l.b16 %v104
    %v168 = vunpack.c.l.b16 %v105
    %v169 = vunpack.c.l.b16 %v106
    %v170 = vunpack.c.l.b16 %v107
    %v171 = vunpack.c.l.b16 %v108
    %v172 = vpack.c.b16 %v157, %v156
    %v173 = vpack.c.b16 %v159, %v158
    %v174 = vpack.c.b16 %v161, %v160
    %v175 = vpack.c.b16 %v163, %v162
    %v176 = vpack.c.b16 %v165, %v164
    %v177 = vpack.c.b16 %v167, %v166
    %v178 = vpack.c.b16 %v169, %v168
    %v179 = vpack.c.b16 %v171, %v170
    %188 = vmatprep.subr.bf16.mxu0 0
    %189 = vmatpush1.bf16.msra.mxu0 %v172
    %190 = vmatprep.subr.bf16.mxu0 0
    %191 = vmatpush1.bf16.msra.mxu0 %v173
    %192 = vmatprep.subr.bf16.mxu0 0
    %193 = vmatpush1.bf16.msra.mxu0 %v174
    %194 = vmatprep.subr.bf16.mxu0 0
    %195 = vmatpush1.bf16.msra.mxu0 %v175
    %196 = vmatprep.subr.bf16.mxu0 0
    %197 = vmatpush1.bf16.msra.mxu0 %v176
    %198 = vmatprep.subr.bf16.mxu0 0
    %199 = vmatpush1.bf16.msra.mxu0 %v177
    %200 = vmatprep.subr.bf16.mxu0 0
    %201 = vmatpush1.bf16.msra.mxu0 %v178
    %202 = vmatprep.subr.bf16.mxu0 0
    %203 = vmatpush1.bf16.msra.mxu0 %v179
    %204 = vmatprep.subr.bf16.mxu0 0
    %205 = vmatpush1.bf16.msra.mxu0 0
    %206 = vmatprep.subr.bf16.mxu0 0
    %207 = vmatpush1.bf16.msra.mxu0 0
    %208 = vmatprep.subr.bf16.mxu0 0
    %209 = vmatpush1.bf16.msra.mxu0 0
    %210 = vmatprep.subr.bf16.mxu0 0
    %211 = vmatpush1.bf16.msra.mxu0 0
    %212 = vmatprep.subr.bf16.mxu0 0
    %213 = vmatpush1.bf16.msra.mxu0 0
    %214 = vmatprep.subr.bf16.mxu0 0
    %215 = vmatpush1.bf16.msra.mxu0 0
    %216 = vmatprep.subr.bf16.mxu0 0
    %217 = vmatpush1.bf16.msra.mxu0 0
    %218 = vmatprep.subr.bf16.mxu0 0
    %219 = vmatpush1.bf16.msra.mxu0 0
    %220 = vmatprep.mubr.bf16.mxu0 0
    %221 = vmatmul.mubr.bf16.gmra.mrb[0].mxu0 %v132
    %v222 = vpop.f32.mrb[0].mxu0
    %v223 = vadd.f32 %v114, %v222
    %v224 = vpop.f32.mrb[0].mxu0
    %v225 = vpop.f32.mrb[0].mxu0
    %v226 = vadd.f32 %v114, %v225
    %v227 = vpop.f32.mrb[0].mxu0
    %228 = vmatprep.mubr.bf16.mxu0 0
    %229 = vmatmul.mubr.bf16.gmra.mrb[0].mxu0 %v133
    %v230 = vpop.f32.mrb[0].mxu0
    %v231 = vadd.f32 %v114, %v230
    %v232 = vpop.f32.mrb[0].mxu0
    %v233 = vpop.f32.mrb[0].mxu0
    %v234 = vadd.f32 %v114, %v233
    %v235 = vpop.f32.mrb[0].mxu0
    %236 = vmatprep.mubr.bf16.mxu0 0
    %237 = vmatmul.mubr.bf16.gmra.mrb[0].mxu0 %v134
    %v238 = vpop.f32.mrb[0].mxu0
    %v239 = vadd.f32 %v114, %v238
    %v240 = vpop.f32.mrb[0].mxu0
    %v241 = vpop.f32.mrb[0].mxu0
    %v242 = vadd.f32 %v114, %v241
    %v243 = vpop.f32.mrb[0].mxu0
    %244 = vmatprep.mubr.bf16.mxu0 0
    %245 = vmatmul.mubr.bf16.gmra.mrb[0].mxu0 %v135
    %v246 = vpop.f32.mrb[0].mxu0
    %v247 = vadd.f32 %v114, %v246
    %v248 = vpop.f32.mrb[0].mxu0
    %v249 = vpop.f32.mrb[0].mxu0
    %v250 = vadd.f32 %v114, %v249
    %v251 = vpop.f32.mrb[0].mxu0
    %252 = vdwg.mxu0
    %v253 = vpack.c.bf16 %v226, %v223
    %v254 = vpack.c.bf16 %v234, %v231
    %v255 = vpack.c.bf16 %v242, %v239
    %v256 = vpack.c.bf16 %v250, %v247
    %v261 = vunpack.c.l.b16 %v253
    %v262 = vunpack.c.h.b16 %v253
    %v263 = vunpack.c.l.b16 %v254
    %v264 = vunpack.c.h.b16 %v254
    %v265 = vunpack.c.l.b16 %v255
    %v266 = vunpack.c.h.b16 %v255
    %v267 = vunpack.c.l.b16 %v256
    %v268 = vunpack.c.h.b16 %v256
    %v269 = vpack.c.b16 %v261, %v261
    %v270 = vpack.c.b16 %v262, %v262
    %v271 = vpack.c.b16 %v263, %v263
    %v272 = vpack.c.b16 %v264, %v264
    %v273 = vpack.c.b16 %v265, %v265
    %v274 = vpack.c.b16 %v266, %v266
    %v275 = vpack.c.b16 %v267, %v267
    %v276 = vpack.c.b16 %v268, %v268
    %285 = vst [vmem:[#allocation3] sm:$0xf] %v269
    %286 = vst [vmem:[#allocation3 + $0x4] sm:$0xf] %v270
    %287 = vst [vmem:[#allocation3 + $0x8] sm:$0xf] %v271
    %288 = vst [vmem:[#allocation3 + $0xc] sm:$0xf] %v272
    %289 = vst [vmem:[#allocation3 + $0x10] sm:$0xf] %v273
    %290 = vst [vmem:[#allocation3 + $0x14] sm:$0xf] %v274
    %291 = vst [vmem:[#allocation3 + $0x18] sm:$0xf] %v275
    %292 = vst [vmem:[#allocation3 + $0x1c] sm:$0xf] %v276
    %v293 = vld [vmem:[#allocation9] sm:$0xf]
    %v294 = vld [vmem:[#allocation9 + $0x4] sm:$0xf]
    %v295 = vld [vmem:[#allocation9 + $0x8] sm:$0xf]
    %v296 = vld [vmem:[#allocation9 + $0xc] sm:$0xf]
    %v297 = vld [vmem:[#allocation9 + $0x10] sm:$0xf]
    %v298 = vld [vmem:[#allocation9 + $0x14] sm:$0xf]
    %v299 = vld [vmem:[#allocation9 + $0x18] sm:$0xf]
    %v300 = vld [vmem:[#allocation9 + $0x1c] sm:$0xf]
    %v301 = vld [vmem:[#allocation9 + $0x20] sm:$0xf]
    %v302 = vld [vmem:[#allocation9 + $0x24] sm:$0xf]
    %v303 = vld [vmem:[#allocation9 + $0x28] sm:$0xf]
    %v304 = vld [vmem:[#allocation9 + $0x2c] sm:$0xf]
    %v305 = vld [vmem:[#allocation9 + $0x30] sm:$0xf]
    %v306 = vld [vmem:[#allocation9 + $0x34] sm:$0xf]
    %v307 = vld [vmem:[#allocation9 + $0x38] sm:$0xf]
    %v308 = vld [vmem:[#allocation9 + $0x3c] sm:$0xf]
    %v309 = vld [vmem:[#allocation2] sm:$0xf]
    %v310 = vld [vmem:[#allocation3] sm:$0xf]
    %v311 = vunpack.c.l.bf16 %v310
    %v328 = vunpack.c.l.b16 %v293
    %v329 = vunpack.c.l.b16 %v294
    %v330 = vunpack.c.l.b16 %v295
    %v331 = vunpack.c.l.b16 %v296
    %v332 = vunpack.c.l.b16 %v297
    %v333 = vunpack.c.l.b16 %v298
    %v334 = vunpack.c.l.b16 %v299
    %v335 = vunpack.c.l.b16 %v300
    %v336 = vunpack.c.l.b16 %v301
    %v337 = vunpack.c.l.b16 %v302
    %v338 = vunpack.c.l.b16 %v303
    %v339 = vunpack.c.l.b16 %v304
    %v340 = vunpack.c.l.b16 %v305
    %v341 = vunpack.c.l.b16 %v306
    %v342 = vunpack.c.l.b16 %v307
    %v343 = vunpack.c.l.b16 %v308
    %v344 = vpack.c.b16 %v329, %v328
    %v345 = vpack.c.b16 %v331, %v330
    %v346 = vpack.c.b16 %v333, %v332
    %v347 = vpack.c.b16 %v335, %v334
    %v348 = vpack.c.b16 %v337, %v336
    %v349 = vpack.c.b16 %v339, %v338
    %v350 = vpack.c.b16 %v341, %v340
    %v351 = vpack.c.b16 %v343, %v342
    %360 = vmatprep.subr.bf16.mxu0 0
    %361 = vmatpush1.bf16.msra.mxu0 %v344
    %362 = vmatprep.subr.bf16.mxu0 0
    %363 = vmatpush1.bf16.msra.mxu0 %v345
    %364 = vmatprep.subr.bf16.mxu0 0
    %365 = vmatpush1.bf16.msra.mxu0 %v346
    %366 = vmatprep.subr.bf16.mxu0 0
    %367 = vmatpush1.bf16.msra.mxu0 %v347
    %368 = vmatprep.subr.bf16.mxu0 0
    %369 = vmatpush1.bf16.msra.mxu0 %v348
    %370 = vmatprep.subr.bf16.mxu0 0
    %371 = vmatpush1.bf16.msra.mxu0 %v349
    %372 = vmatprep.subr.bf16.mxu0 0
    %373 = vmatpush1.bf16.msra.mxu0 %v350
    %374 = vmatprep.subr.bf16.mxu0 0
    %375 = vmatpush1.bf16.msra.mxu0 %v351
    %376 = vmatprep.subr.bf16.mxu0 0
    %377 = vmatpush1.bf16.msra.mxu0 0
    %378 = vmatprep.subr.bf16.mxu0 0
    %379 = vmatpush1.bf16.msra.mxu0 0
    %380 = vmatprep.subr.bf16.mxu0 0
    %381 = vmatpush1.bf16.msra.mxu0 0
    %382 = vmatprep.subr.bf16.mxu0 0
    %383 = vmatpush1.bf16.msra.mxu0 0
    %384 = vmatprep.subr.bf16.mxu0 0
    %385 = vmatpush1.bf16.msra.mxu0 0
    %386 = vmatprep.subr.bf16.mxu0 0
    %387 = vmatpush1.bf16.msra.mxu0 0
    %388 = vmatprep.subr.bf16.mxu0 0
    %389 = vmatpush1.bf16.msra.mxu0 0
    %390 = vmatprep.subr.bf16.mxu0 0
    %391 = vmatpush1.bf16.msra.mxu0 0
    %392 = vmatprep.mubr.bf16.mxu0 0
    %393 = vmatmul.mubr.bf16.gmra.mrb[0].mxu0 %v309
    %v394 = vpop.f32.mrb[0].mxu0
    %v395 = vadd.f32 0.0, %v394
    %v396 = vpop.f32.mrb[0].mxu0
    %v397 = vpop.f32.mrb[0].mxu0
    %v398 = vpop.f32.mrb[0].mxu0
    %399 = vdwg.mxu0
    %v400 = vadd.f32 %v311, %v395
    %v401 = vtanh.pop %v400
    %v402 = vpack.c.bf16 %v401, %v401
    %403 = vst [vmem:[#allocation3] sm:$0xf] %v402
    %s404 = scalar_lea.vmem [#allocation3], 4
    %v405 = vld [vmem:[%s404] sm:$0xf]
    %v406 = vunpack.c.l.bf16 %v405
    %407 = vmatprep.subr.bf16.mxu0 0
    %408 = vmatpush1.bf16.msra.mxu0 %v344
    %409 = vmatprep.subr.bf16.mxu0 0
    %410 = vmatpush1.bf16.msra.mxu0 %v345
    %411 = vmatprep.subr.bf16.mxu0 0
    %412 = vmatpush1.bf16.msra.mxu0 %v346
    %413 = vmatprep.subr.bf16.mxu0 0
    %414 = vmatpush1.bf16.msra.mxu0 %v347
    %415 = vmatprep.subr.bf16.mxu0 0
    %416 = vmatpush1.bf16.msra.mxu0 %v348
    %417 = vmatprep.subr.bf16.mxu0 0
    %418 = vmatpush1.bf16.msra.mxu0 %v349
    %419 = vmatprep.subr.bf16.mxu0 0
    %420 = vmatpush1.bf16.msra.mxu0 %v350
    %421 = vmatprep.subr.bf16.mxu0 0
    %422 = vmatpush1.bf16.msra.mxu0 %v351
    %423 = vmatprep.subr.bf16.mxu0 0
    %424 = vmatpush1.bf16.msra.mxu0 0
    %425 = vmatprep.subr.bf16.mxu0 0
    %426 = vmatpush1.bf16.msra.mxu0 0
    %427 = vmatprep.subr.bf16.mxu0 0
    %428 = vmatpush1.bf16.msra.mxu0 0
    %429 = vmatprep.subr.bf16.mxu0 0
    %430 = vmatpush1.bf16.msra.mxu0 0
    %431 = vmatprep.subr.bf16.mxu0 0
    %432 = vmatpush1.bf16.msra.mxu0 0
    %433 = vmatprep.subr.bf16.mxu0 0
    %434 = vmatpush1.bf16.msra.mxu0 0
    %435 = vmatprep.subr.bf16.mxu0 0
    %436 = vmatpush1.bf16.msra.mxu0 0
    %437 = vmatprep.subr.bf16.mxu0 0
    %438 = vmatpush1.bf16.msra.mxu0 0
    %439 = vmatprep.mubr.bf16.mxu0 0
    %440 = vmatmul.mubr.bf16.gmra.mrb[0].mxu0 %v402
    %v441 = vpop.f32.mrb[0].mxu0
    %v442 = vadd.f32 0.0, %v441
    %v443 = vpop.f32.mrb[0].mxu0
    %v444 = vpop.f32.mrb[0].mxu0
    %v445 = vpop.f32.mrb[0].mxu0
    %446 = vdwg.mxu0
    %v447 = vadd.f32 %v406, %v442
    %v448 = vtanh.pop %v447
    %v449 = vpack.c.bf16 %v448, %v448
    %450 = vst [vmem:[%s404] sm:$0xf] %v449
    %s451 = scalar_lea.vmem [#allocation3], 8
    %v452 = vld [vmem:[%s451] sm:$0xf]
    %v453 = vunpack.c.l.bf16 %v452
    %454 = vmatprep.subr.bf16.mxu0 0
    %455 = vmatpush1.bf16.msra.mxu0 %v344
    %456 = vmatprep.subr.bf16.mxu0 0
    %457 = vmatpush1.bf16.msra.mxu0 %v345
    %458 = vmatprep.subr.bf16.mxu0 0
    %459 = vmatpush1.bf16.msra.mxu0 %v346
    %460 = vmatprep.subr.bf16.mxu0 0
    %461 = vmatpush1.bf16.msra.mxu0 %v347
    %462 = vmatprep.subr.bf16.mxu0 0
    %463 = vmatpush1.bf16.msra.mxu0 %v348
    %464 = vmatprep.subr.bf16.mxu0 0
    %465 = vmatpush1.bf16.msra.mxu0 %v349
    %466 = vmatprep.subr.bf16.mxu0 0
    %467 = vmatpush1.bf16.msra.mxu0 %v350
    %468 = vmatprep.subr.bf16.mxu0 0
    %469 = vmatpush1.bf16.msra.mxu0 %v351
    %470 = vmatprep.subr.bf16.mxu0 0
    %471 = vmatpush1.bf16.msra.mxu0 0
    %472 = vmatprep.subr.bf16.mxu0 0
    %473 = vmatpush1.bf16.msra.mxu0 0
    %474 = vmatprep.subr.bf16.mxu0 0
    %475 = vmatpush1.bf16.msra.mxu0 0
    %476 = vmatprep.subr.bf16.mxu0 0
    %477 = vmatpush1.bf16.msra.mxu0 0
    %478 = vmatprep.subr.bf16.mxu0 0
    %479 = vmatpush1.bf16.msra.mxu0 0
    %480 = vmatprep.subr.bf16.mxu0 0
    %481 = vmatpush1.bf16.msra.mxu0 0
    %482 = vmatprep.subr.bf16.mxu0 0
    %483 = vmatpush1.bf16.msra.mxu0 0
    %484 = vmatprep.subr.bf16.mxu0 0
    %485 = vmatpush1.bf16.msra.mxu0 0
    %486 = vmatprep.mubr.bf16.mxu0 0
    %487 = vmatmul.mubr.bf16.gmra.mrb[0].mxu0 %v449
    %v488 = vpop.f32.mrb[0].mxu0
    %v489 = vadd.f32 0.0, %v488
    %v490 = vpop.f32.mrb[0].mxu0
    %v491 = vpop.f32.mrb[0].mxu0
    %v492 = vpop.f32.mrb[0].mxu0
    %493 = vdwg.mxu0
    %v494 = vadd.f32 %v453, %v489
    %v495 = vtanh.pop %v494
    %v496 = vpack.c.bf16 %v495, %v495
    %497 = vst [vmem:[%s451] sm:$0xf] %v496
    %s498 = scalar_lea.vmem [#allocation3], 12
    %v499 = vld [vmem:[%s498] sm:$0xf]
    %v500 = vunpack.c.l.bf16 %v499
    %501 = vmatprep.subr.bf16.mxu0 0
    %502 = vmatpush1.bf16.msra.mxu0 %v344
    %503 = vmatprep.subr.bf16.mxu0 0
    %504 = vmatpush1.bf16.msra.mxu0 %v345
    %505 = vmatprep.subr.bf16.mxu0 0
    %506 = vmatpush1.bf16.msra.mxu0 %v346
    %507 = vmatprep.subr.bf16.mxu0 0
    %508 = vmatpush1.bf16.msra.mxu0 %v347
    %509 = vmatprep.subr.bf16.mxu0 0
    %510 = vmatpush1.bf16.msra.mxu0 %v348
    %511 = vmatprep.subr.bf16.mxu0 0
    %512 = vmatpush1.bf16.msra.mxu0 %v349
    %513 = vmatprep.subr.bf16.mxu0 0
    %514 = vmatpush1.bf16.msra.mxu0 %v350
    %515 = vmatprep.subr.bf16.mxu0 0
    %516 = vmatpush1.bf16.msra.mxu0 %v351
    %517 = vmatprep.subr.bf16.mxu0 0
    %518 = vmatpush1.bf16.msra.mxu0 0
    %519 = vmatprep.subr.bf16.mxu0 0
    %520 = vmatpush1.bf16.msra.mxu0 0
    %521 = vmatprep.subr.bf16.mxu0 0
    %522 = vmatpush1.bf16.msra.mxu0 0
    %523 = vmatprep.subr.bf16.mxu0 0
    %524 = vmatpush1.bf16.msra.mxu0 0
    %525 = vmatprep.subr.bf16.mxu0 0
    %526 = vmatpush1.bf16.msra.mxu0 0
    %527 = vmatprep.subr.bf16.mxu0 0
    %528 = vmatpush1.bf16.msra.mxu0 0
    %529 = vmatprep.subr.bf16.mxu0 0
    %530 = vmatpush1.bf16.msra.mxu0 0
    %531 = vmatprep.subr.bf16.mxu0 0
    %532 = vmatpush1.bf16.msra.mxu0 0
    %533 = vmatprep.mubr.bf16.mxu0 0
    %534 = vmatmul.mubr.bf16.gmra.mrb[0].mxu0 %v496
    %v535 = vpop.f32.mrb[0].mxu0
    %v536 = vadd.f32 0.0, %v535
    %v537 = vpop.f32.mrb[0].mxu0
    %v538 = vpop.f32.mrb[0].mxu0
    %v539 = vpop.f32.mrb[0].mxu0
    %540 = vdwg.mxu0
    %v541 = vadd.f32 %v500, %v536
    %v542 = vtanh.pop %v541
    %v543 = vpack.c.bf16 %v542, %v542
    %544 = vst [vmem:[%s498] sm:$0xf] %v543
    %s545 = scalar_lea.vmem [#allocation3], 16
    %v546 = vld [vmem:[%s545] sm:$0xf]
    %v547 = vunpack.c.l.bf16 %v546
    %548 = vmatprep.subr.bf16.mxu0 0
    %549 = vmatpush1.bf16.msra.mxu0 %v344
    %550 = vmatprep.subr.bf16.mxu0 0
    %551 = vmatpush1.bf16.msra.mxu0 %v345
    %552 = vmatprep.subr.bf16.mxu0 0
    %553 = vmatpush1.bf16.msra.mxu0 %v346
    %554 = vmatprep.subr.bf16.mxu0 0
    %555 = vmatpush1.bf16.msra.mxu0 %v347
    %556 = vmatprep.subr.bf16.mxu0 0
    %557 = vmatpush1.bf16.msra.mxu0 %v348
    %558 = vmatprep.subr.bf16.mxu0 0
    %559 = vmatpush1.bf16.msra.mxu0 %v349
    %560 = vmatprep.subr.bf16.mxu0 0
    %561 = vmatpush1.bf16.msra.mxu0 %v350
    %562 = vmatprep.subr.bf16.mxu0 0
    %563 = vmatpush1.bf16.msra.mxu0 %v351
    %564 = vmatprep.subr.bf16.mxu0 0
    %565 = vmatpush1.bf16.msra.mxu0 0
    %566 = vmatprep.subr.bf16.mxu0 0
    %567 = vmatpush1.bf16.msra.mxu0 0
    %568 = vmatprep.subr.bf16.mxu0 0
    %569 = vmatpush1.bf16.msra.mxu0 0
    %570 = vmatprep.subr.bf16.mxu0 0
    %571 = vmatpush1.bf16.msra.mxu0 0
    %572 = vmatprep.subr.bf16.mxu0 0
    %573 = vmatpush1.bf16.msra.mxu0 0
    %574 = vmatprep.subr.bf16.mxu0 0
    %575 = vmatpush1.bf16.msra.mxu0 0
    %576 = vmatprep.subr.bf16.mxu0 0
    %577 = vmatpush1.bf16.msra.mxu0 0
    %578 = vmatprep.subr.bf16.mxu0 0
    %579 = vmatpush1.bf16.msra.mxu0 0
    %580 = vmatprep.mubr.bf16.mxu0 0
    %581 = vmatmul.mubr.bf16.gmra.mrb[0].mxu0 %v543
    %v582 = vpop.f32.mrb[0].mxu0
    %v583 = vadd.f32 0.0, %v582
    %v584 = vpop.f32.mrb[0].mxu0
    %v585 = vpop.f32.mrb[0].mxu0
    %v586 = vpop.f32.mrb[0].mxu0
    %587 = vdwg.mxu0
    %v588 = vadd.f32 %v547, %v583
    %v589 = vtanh.pop %v588
    %v590 = vpack.c.bf16 %v589, %v589
    %591 = vst [vmem:[%s545] sm:$0xf] %v590
    %s592 = scalar_lea.vmem [#allocation3], 20
    %v593 = vld [vmem:[%s592] sm:$0xf]
    %v594 = vunpack.c.l.bf16 %v593
    %595 = vmatprep.subr.bf16.mxu0 0
    %596 = vmatpush1.bf16.msra.mxu0 %v344
    %597 = vmatprep.subr.bf16.mxu0 0
    %598 = vmatpush1.bf16.msra.mxu0 %v345
    %599 = vmatprep.subr.bf16.mxu0 0
    %600 = vmatpush1.bf16.msra.mxu0 %v346
    %601 = vmatprep.subr.bf16.mxu0 0
    %602 = vmatpush1.bf16.msra.mxu0 %v347
    %603 = vmatprep.subr.bf16.mxu0 0
    %604 = vmatpush1.bf16.msra.mxu0 %v348
    %605 = vmatprep.subr.bf16.mxu0 0
    %606 = vmatpush1.bf16.msra.mxu0 %v349
    %607 = vmatprep.subr.bf16.mxu0 0
    %608 = vmatpush1.bf16.msra.mxu0 %v350
    %609 = vmatprep.subr.bf16.mxu0 0
    %610 = vmatpush1.bf16.msra.mxu0 %v351
    %611 = vmatprep.subr.bf16.mxu0 0
    %612 = vmatpush1.bf16.msra.mxu0 0
    %613 = vmatprep.subr.bf16.mxu0 0
    %614 = vmatpush1.bf16.msra.mxu0 0
    %615 = vmatprep.subr.bf16.mxu0 0
    %616 = vmatpush1.bf16.msra.mxu0 0
    %617 = vmatprep.subr.bf16.mxu0 0
    %618 = vmatpush1.bf16.msra.mxu0 0
    %619 = vmatprep.subr.bf16.mxu0 0
    %620 = vmatpush1.bf16.msra.mxu0 0
    %621 = vmatprep.subr.bf16.mxu0 0
    %622 = vmatpush1.bf16.msra.mxu0 0
    %623 = vmatprep.subr.bf16.mxu0 0
    %624 = vmatpush1.bf16.msra.mxu0 0
    %625 = vmatprep.subr.bf16.mxu0 0
    %626 = vmatpush1.bf16.msra.mxu0 0
    %627 = vmatprep.mubr.bf16.mxu0 0
    %628 = vmatmul.mubr.bf16.gmra.mrb[0].mxu0 %v590
    %v629 = vpop.f32.mrb[0].mxu0
    %v630 = vadd.f32 0.0, %v629
    %v631 = vpop.f32.mrb[0].mxu0
    %v632 = vpop.f32.mrb[0].mxu0
    %v633 = vpop.f32.mrb[0].mxu0
    %634 = vdwg.mxu0
    %v635 = vadd.f32 %v594, %v630
    %v636 = vtanh.pop %v635
    %v637 = vpack.c.bf16 %v636, %v636
    %638 = vst [vmem:[%s592] sm:$0xf] %v637
    %s639 = scalar_lea.vmem [#allocation3], 24
    %v640 = vld [vmem:[%s639] sm:$0xf]
    %v641 = vunpack.c.l.bf16 %v640
    %642 = vmatprep.subr.bf16.mxu0 0
    %643 = vmatpush1.bf16.msra.mxu0 %v344
    %644 = vmatprep.subr.bf16.mxu0 0
    %645 = vmatpush1.bf16.msra.mxu0 %v345
    %646 = vmatprep.subr.bf16.mxu0 0
    %647 = vmatpush1.bf16.msra.mxu0 %v346
    %648 = vmatprep.subr.bf16.mxu0 0
    %649 = vmatpush1.bf16.msra.mxu0 %v347
    %650 = vmatprep.subr.bf16.mxu0 0
    %651 = vmatpush1.bf16.msra.mxu0 %v348
    %652 = vmatprep.subr.bf16.mxu0 0
    %653 = vmatpush1.bf16.msra.mxu0 %v349
    %654 = vmatprep.subr.bf16.mxu0 0
    %655 = vmatpush1.bf16.msra.mxu0 %v350
    %656 = vmatprep.subr.bf16.mxu0 0
    %657 = vmatpush1.bf16.msra.mxu0 %v351
    %658 = vmatprep.subr.bf16.mxu0 0
    %659 = vmatpush1.bf16.msra.mxu0 0
    %660 = vmatprep.subr.bf16.mxu0 0
    %661 = vmatpush1.bf16.msra.mxu0 0
    %662 = vmatprep.subr.bf16.mxu0 0
    %663 = vmatpush1.bf16.msra.mxu0 0
    %664 = vmatprep.subr.bf16.mxu0 0
    %665 = vmatpush1.bf16.msra.mxu0 0
    %666 = vmatprep.subr.bf16.mxu0 0
    %667 = vmatpush1.bf16.msra.mxu0 0
    %668 = vmatprep.subr.bf16.mxu0 0
    %669 = vmatpush1.bf16.msra.mxu0 0
    %670 = vmatprep.subr.bf16.mxu0 0
    %671 = vmatpush1.bf16.msra.mxu0 0
    %672 = vmatprep.subr.bf16.mxu0 0
    %673 = vmatpush1.bf16.msra.mxu0 0
    %674 = vmatprep.mubr.bf16.mxu0 0
    %675 = vmatmul.mubr.bf16.gmra.mrb[0].mxu0 %v637
    %v676 = vpop.f32.mrb[0].mxu0
    %v677 = vadd.f32 0.0, %v676
    %v678 = vpop.f32.mrb[0].mxu0
    %v679 = vpop.f32.mrb[0].mxu0
    %v680 = vpop.f32.mrb[0].mxu0
    %681 = vdwg.mxu0
    %v682 = vadd.f32 %v641, %v677
    %v683 = vtanh.pop %v682
    %v684 = vpack.c.bf16 %v683, %v683
    %685 = vst [vmem:[%s639] sm:$0xf] %v684
    %s686 = scalar_lea.vmem [#allocation3], 28
    %v687 = vld [vmem:[%s686] sm:$0xf]
    %v688 = vunpack.c.l.bf16 %v687
    %689 = vmatprep.subr.bf16.mxu0 0
    %690 = vmatpush1.bf16.msra.mxu0 %v344
    %691 = vmatprep.subr.bf16.mxu0 0
    %692 = vmatpush1.bf16.msra.mxu0 %v345
    %693 = vmatprep.subr.bf16.mxu0 0
    %694 = vmatpush1.bf16.msra.mxu0 %v346
    %695 = vmatprep.subr.bf16.mxu0 0
    %696 = vmatpush1.bf16.msra.mxu0 %v347
    %697 = vmatprep.subr.bf16.mxu0 0
    %698 = vmatpush1.bf16.msra.mxu0 %v348
    %699 = vmatprep.subr.bf16.mxu0 0
    %700 = vmatpush1.bf16.msra.mxu0 %v349
    %701 = vmatprep.subr.bf16.mxu0 0
    %702 = vmatpush1.bf16.msra.mxu0 %v350
    %703 = vmatprep.subr.bf16.mxu0 0
    %704 = vmatpush1.bf16.msra.mxu0 %v351
    %705 = vmatprep.subr.bf16.mxu0 0
    %706 = vmatpush1.bf16.msra.mxu0 0
    %707 = vmatprep.subr.bf16.mxu0 0
    %708 = vmatpush1.bf16.msra.mxu0 0
    %709 = vmatprep.subr.bf16.mxu0 0
    %710 = vmatpush1.bf16.msra.mxu0 0
    %711 = vmatprep.subr.bf16.mxu0 0
    %712 = vmatpush1.bf16.msra.mxu0 0
    %713 = vmatprep.subr.bf16.mxu0 0
    %714 = vmatpush1.bf16.msra.mxu0 0
    %715 = vmatprep.subr.bf16.mxu0 0
    %716 = vmatpush1.bf16.msra.mxu0 0
    %717 = vmatprep.subr.bf16.mxu0 0
    %718 = vmatpush1.bf16.msra.mxu0 0
    %719 = vmatprep.subr.bf16.mxu0 0
    %720 = vmatpush1.bf16.msra.mxu0 0
    %721 = vmatprep.mubr.bf16.mxu0 0
    %722 = vmatmul.mubr.bf16.gmra.mrb[0].mxu0 %v684
    %v723 = vpop.f32.mrb[0].mxu0
    %v724 = vadd.f32 0.0, %v723
    %v725 = vpop.f32.mrb[0].mxu0
    %v726 = vpop.f32.mrb[0].mxu0
    %v727 = vpop.f32.mrb[0].mxu0
    %728 = vdwg.mxu0
    %v729 = vadd.f32 %v688, %v724
    %v730 = vtanh.pop %v729
    %v731 = vpack.c.bf16 %v730, %v730
    %732 = vst [vmem:[%s686] sm:$0xf] %v731
    %733 = vst [vmem:[#allocation2] sm:$0xf] %v731
    %v734 = vld [vmem:[#allocation3] sm:$0xf]
    %v735 = vld [vmem:[#allocation3 + $0x4] sm:$0xf]
    %v736 = vld [vmem:[#allocation3 + $0x8] sm:$0xf]
    %v737 = vld [vmem:[#allocation3 + $0xc] sm:$0xf]
    %v738 = vld [vmem:[#allocation3 + $0x10] sm:$0xf]
    %v739 = vld [vmem:[#allocation3 + $0x14] sm:$0xf]
    %v740 = vld [vmem:[#allocation3 + $0x18] sm:$0xf]
    %v741 = vld [vmem:[#allocation3 + $0x1c] sm:$0xf]
    %v742 = vld [vmem:[#allocation10] sm:$0xf]
    %v743 = vld [vmem:[#allocation10 + $0x4] sm:$0xf]
    %v744 = vld [vmem:[#allocation10 + $0x8] sm:$0xf]
    %v745 = vld [vmem:[#allocation10 + $0xc] sm:$0xf]
    %v746 = vld [vmem:[#allocation10 + $0x10] sm:$0xf]
    %v747 = vld [vmem:[#allocation10 + $0x14] sm:$0xf]
    %v748 = vld [vmem:[#allocation10 + $0x18] sm:$0xf]
    %v749 = vld [vmem:[#allocation10 + $0x1c] sm:$0xf]
    %v750 = vld [vmem:[#allocation10 + $0x20] sm:$0xf]
    %v751 = vld [vmem:[#allocation10 + $0x24] sm:$0xf]
    %v752 = vld [vmem:[#allocation10 + $0x28] sm:$0xf]
    %v753 = vld [vmem:[#allocation10 + $0x2c] sm:$0xf]
    %v754 = vld [vmem:[#allocation10 + $0x30] sm:$0xf]
    %v755 = vld [vmem:[#allocation10 + $0x34] sm:$0xf]
    %v756 = vld [vmem:[#allocation10 + $0x38] sm:$0xf]
    %v757 = vld [vmem:[#allocation10 + $0x3c] sm:$0xf]
    %v758 = vld [vmem:[%s5] sm:$0x1]
    %v760 = vlaneseq
    %v761 = vshrl.u32 %v760, 7
    %v762 = vsub.s32 0, %v761
    %v763 = vrot.slane %v758, %v762
    %v773 = vunpack.c.l.b16 %v734
    %v774 = vunpack.c.l.b16 %v735
    %v775 = vunpack.c.l.b16 %v736
    %v776 = vunpack.c.l.b16 %v737
    %v777 = vunpack.c.l.b16 %v738
    %v778 = vunpack.c.l.b16 %v739
    %v779 = vunpack.c.l.b16 %v740
    %v780 = vunpack.c.l.b16 %v741
    %v781 = vpack.c.b16 %v774, %v773
    %v782 = vpack.c.b16 %v776, %v775
    %v783 = vpack.c.b16 %v778, %v777
    %v784 = vpack.c.b16 %v780, %v779
    %v805 = vunpack.c.l.b16 %v742
    %v806 = vunpack.c.l.b16 %v743
    %v807 = vunpack.c.l.b16 %v744
    %v808 = vunpack.c.l.b16 %v745
    %v809 = vunpack.c.l.b16 %v746
    %v810 = vunpack.c.l.b16 %v747
    %v811 = vunpack.c.l.b16 %v748
    %v812 = vunpack.c.l.b16 %v749
    %v813 = vunpack.c.l.b16 %v750
    %v814 = vunpack.c.l.b16 %v751
    %v815 = vunpack.c.l.b16 %v752
    %v816 = vunpack.c.l.b16 %v753
    %v817 = vunpack.c.l.b16 %v754
    %v818 = vunpack.c.l.b16 %v755
    %v819 = vunpack.c.l.b16 %v756
    %v820 = vunpack.c.l.b16 %v757
    %v821 = vpack.c.b16 %v806, %v805
    %v822 = vpack.c.b16 %v808, %v807
    %v823 = vpack.c.b16 %v810, %v809
    %v824 = vpack.c.b16 %v812, %v811
    %v825 = vpack.c.b16 %v814, %v813
    %v826 = vpack.c.b16 %v816, %v815
    %v827 = vpack.c.b16 %v818, %v817
    %v828 = vpack.c.b16 %v820, %v819
    %837 = vmatprep.subr.bf16.mxu0 0
    %838 = vmatpush1.bf16.msra.mxu0 %v821
    %839 = vmatprep.subr.bf16.mxu0 0
    %840 = vmatpush1.bf16.msra.mxu0 %v822
    %841 = vmatprep.subr.bf16.mxu0 0
    %842 = vmatpush1.bf16.msra.mxu0 %v823
    %843 = vmatprep.subr.bf16.mxu0 0
    %844 = vmatpush1.bf16.msra.mxu0 %v824
    %845 = vmatprep.subr.bf16.mxu0 0
    %846 = vmatpush1.bf16.msra.mxu0 %v825
    %847 = vmatprep.subr.bf16.mxu0 0
    %848 = vmatpush1.bf16.msra.mxu0 %v826
    %849 = vmatprep.subr.bf16.mxu0 0
    %850 = vmatpush1.bf16.msra.mxu0 %v827
    %851 = vmatprep.subr.bf16.mxu0 0
    %852 = vmatpush1.bf16.msra.mxu0 %v828
    %853 = vmatprep.subr.bf16.mxu0 0
    %854 = vmatpush1.bf16.msra.mxu0 0
    %855 = vmatprep.subr.bf16.mxu0 0
    %856 = vmatpush1.bf16.msra.mxu0 0
    %857 = vmatprep.subr.bf16.mxu0 0
    %858 = vmatpush1.bf16.msra.mxu0 0
    %859 = vmatprep.subr.bf16.mxu0 0
    %860 = vmatpush1.bf16.msra.mxu0 0
    %861 = vmatprep.subr.bf16.mxu0 0
    %862 = vmatpush1.bf16.msra.mxu0 0
    %863 = vmatprep.subr.bf16.mxu0 0
    %864 = vmatpush1.bf16.msra.mxu0 0
    %865 = vmatprep.subr.bf16.mxu0 0
    %866 = vmatpush1.bf16.msra.mxu0 0
    %867 = vmatprep.subr.bf16.mxu0 0
    %868 = vmatpush1.bf16.msra.mxu0 0
    %869 = vmatprep.mubr.bf16.mxu0 0
    %870 = vmatmul.mubr.bf16.gmra.mrb[0].mxu0 %v781
    %v871 = vpop.f32.mrb[0].mxu0
    %v872 = vadd.f32 %v763, %v871
    %v873 = vpop.f32.mrb[0].mxu0
    %v874 = vpop.f32.mrb[0].mxu0
    %v875 = vadd.f32 %v763, %v874
    %v876 = vpop.f32.mrb[0].mxu0
    %877 = vmatprep.mubr.bf16.mxu0 0
    %878 = vmatmul.mubr.bf16.gmra.mrb[0].mxu0 %v782
    %v879 = vpop.f32.mrb[0].mxu0
    %v880 = vadd.f32 %v763, %v879
    %v881 = vpop.f32.mrb[0].mxu0
    %v882 = vpop.f32.mrb[0].mxu0
    %v883 = vadd.f32 %v763, %v882
    %v884 = vpop.f32.mrb[0].mxu0
    %885 = vmatprep.mubr.bf16.mxu0 0
    %886 = vmatmul.mubr.bf16.gmra.mrb[0].mxu0 %v783
    %v887 = vpop.f32.mrb[0].mxu0
    %v888 = vadd.f32 %v763, %v887
    %v889 = vpop.f32.mrb[0].mxu0
    %v890 = vpop.f32.mrb[0].mxu0
    %v891 = vadd.f32 %v763, %v890
    %v892 = vpop.f32.mrb[0].mxu0
    %893 = vmatprep.mubr.bf16.mxu0 0
    %894 = vmatmul.mubr.bf16.gmra.mrb[0].mxu0 %v784
    %v895 = vpop.f32.mrb[0].mxu0
    %v896 = vadd.f32 %v763, %v895
    %v897 = vpop.f32.mrb[0].mxu0
    %v898 = vpop.f32.mrb[0].mxu0
    %v899 = vadd.f32 %v763, %v898
    %v900 = vpop.f32.mrb[0].mxu0
    %901 = vdwg.mxu0
    %v902 = vpack.c.bf16 %v875, %v872
    %v903 = vpack.c.bf16 %v883, %v880
    %v904 = vpack.c.bf16 %v891, %v888
    %v905 = vpack.c.bf16 %v899, %v896
    %v910 = vunpack.c.l.b16 %v902
    %v911 = vunpack.c.h.b16 %v902
    %v912 = vunpack.c.l.b16 %v903
    %v913 = vunpack.c.h.b16 %v903
    %v914 = vunpack.c.l.b16 %v904
    %v915 = vunpack.c.h.b16 %v904
    %v916 = vunpack.c.l.b16 %v905
    %v917 = vunpack.c.h.b16 %v905
    %v918 = vpack.c.b16 %v910, %v910
    %v919 = vpack.c.b16 %v911, %v911
    %v920 = vpack.c.b16 %v912, %v912
    %v921 = vpack.c.b16 %v913, %v913
    %v922 = vpack.c.b16 %v914, %v914
    %v923 = vpack.c.b16 %v915, %v915
    %v924 = vpack.c.b16 %v916, %v916
    %v925 = vpack.c.b16 %v917, %v917
    %934 = vst [vmem:[#allocation12] sm:$0xf] %v918
    %935 = vst [vmem:[#allocation12 + $0x4] sm:$0xf] %v919
    %936 = vst [vmem:[#allocation12 + $0x8] sm:$0xf] %v920
    %937 = vst [vmem:[#allocation12 + $0xc] sm:$0xf] %v921
    %938 = vst [vmem:[#allocation12 + $0x10] sm:$0xf] %v922
    %939 = vst [vmem:[#allocation12 + $0x14] sm:$0xf] %v923
    %940 = vst [vmem:[#allocation12 + $0x18] sm:$0xf] %v924
    %941 = vst [vmem:[#allocation12 + $0x1c] sm:$0xf] %v925
    // Predicated region
    $region46: #{tpu_custom_call.1} parent=1 // pred_check
      _
    $region47: #{tpu_custom_call.1} parent=1 // pred_check_branch
      %943 = sbr.rel (0) target = $region49
    $region48: #{tpu_custom_call.1} parent=1 // pred_region
      %s945 = ssub.s32 512, 512
      %946 = vsyncadd [#allocation6], %s945
      %s947 = sshll.u32 [#allocation12], 4
      %s948 = int_to_ptr.vmem [resolvable:$true] %s947
      %953 = dma.vmem_to_hbm [thread:$0]  %s948, 512, %s6, [#allocation6], 64, 64, 4
    $region49: #{tpu_custom_call.1} parent=1 // pred_fallthru
      _
    // Predicated region
    $region50: #{tpu_custom_call.1} parent=1 // pred_check
      _
    $region51: #{tpu_custom_call.1} parent=1 // pred_check_branch
      %955 = sbr.rel (0) target = $region53
    $region52: #{tpu_custom_call.1} parent=1 // pred_region
      %956 = dma.done [#allocation6], 512
    $region53: #{tpu_custom_call.1} parent=1 // pred_fallthru
      _
    %957 = vsyncpa [#allocation5], 1
    %958 = vsyncpa [#allocation8], 1
    %959 = vsyncpa [#allocation11], 1
    %960 = vsyncpa [#allocation6], 1

</llo_original>
